<compile_context>
chip_gen: v5e
topology: v5e:2x2
jax: 0.10.0
libtpu: 0.0.40
codegen_flags: <defaults>
</compile_context>

<pallas_src>
import math

import jax
import jax.numpy as jnp
from jax.experimental import pallas as pl
from jax.experimental.pallas import tpu as pltpu


def _round_up(a, b):
    return -(-a // b) * b


def _vmem_capacity_bytes():
    try:
        return int(pltpu.get_tpu_info().vmem_capacity_bytes)
    except Exception:
        return 64 * 1024 * 1024  # conservative: v7x per-TensorCore VMEM


def _mlp_kernel(x_ref, w1_ref, b1_ref, w2_ref, b2_ref, o_ref):
    """o = relu(x @ W1 + b1) @ W2 + b2 on one row block.

    x_ref : (tm, d_in)     bf16 row block
    w1_ref: (d_in, d_hid)  bf16 fc1 weight (in x out layout)
    b1_ref: (1, d_hid)     f32 fc1 bias
    w2_ref: (d_hid, d_out) bf16 fc2 weight (in x out layout)
    b2_ref: (1, d_out)     f32 fc2 bias
    o_ref : (tm, d_out)
    """
    h = jnp.dot(x_ref[...], w1_ref[...], preferred_element_type=jnp.float32)
    h = jnp.maximum(h + b1_ref[...], 0.0)                 # fc1 bias + ReLU (f32)
    h = h.astype(w2_ref.dtype)                            # bf16 before fc2
    o = jnp.dot(h, w2_ref[...], preferred_element_type=jnp.float32)
    o_ref[...] = (o + b2_ref[...]).astype(o_ref.dtype)
    # Dropout == identity (eval mode).
    # TODO(synk): training-mode dropout would need pltpu.prng_seed +
    # pltpu.prng_random_bits to build a keep-mask in-kernel.


def mlp_forward(x, params, *, compute_dtype=jnp.bfloat16, block_m=512):
    """x: (..., hidden_size) -> (..., hidden_size). Matches Mlp.forward in eval
    mode (dropout = identity). Matmuls run in `compute_dtype` with f32 accum."""
    w1, b1, w2, b2 = params
    d_in, d_hid = w1.shape
    d_hid2, d_out = w2.shape
    assert d_hid == d_hid2 and x.shape[-1] == d_in

    orig_shape = x.shape
    out_dtype = x.dtype

    x2 = x.reshape(-1, d_in).astype(compute_dtype)
    w1c = w1.astype(compute_dtype)
    w2c = w2.astype(compute_dtype)
    b1c = b1.reshape(1, d_hid).astype(jnp.float32)
    b2c = b2.reshape(1, d_out).astype(jnp.float32)
    m = x2.shape[0]

    cdt = jnp.dtype(compute_dtype).itemsize
    odt = jnp.dtype(out_dtype).itemsize

    # ---- generation-aware row-block size (tm) -------------------------------
    vmem_cap = _vmem_capacity_bytes()
    w_bytes = (w1c.size + w2c.size) * cdt + (b1c.size + b2c.size) * 4

    def _tile_bytes(tm):
        # pipelined (double-buffered) x and out blocks + live f32 intermediate
        return (2 * tm * d_in * cdt + 2 * tm * d_out * 4
                + tm * d_hid * 4 + tm * d_out * 4)

    budget = int(0.6 * vmem_cap) - 2 * w_bytes
    tm = 8
    for cand in (1024, 512, 384, 256, 128, 64, 32, 16, 8):
        if cand <= block_m and _tile_bytes(cand) <= budget:
            tm = cand
            break
    # Give v7x's second TensorCore a block when M is modest (>= 2 grid steps).
    if m > 8:
        tm = min(tm, _round_up(pl.cdiv(m, 2), 8))
    tm = max(tm, 8)
    nm = pl.cdiv(m, tm)

    vmem_limit = int(min(max(2 * (2 * w_bytes + _tile_bytes(tm)), 16 << 20),
                         int(0.9 * vmem_cap)))

    cost = pl.CostEstimate(
        flops=2 * m * d_in * d_hid + 2 * m * d_hid * d_out,
        transcendentals=0,
        bytes_accessed=int(x2.size * cdt + w_bytes + m * d_out * odt),
    )

    def _build(single_buffer_weights):
        wkw = (dict(pipeline_mode=pl.Buffered(1))
               if single_buffer_weights else {})
        return pl.pallas_call(
            _mlp_kernel,
            out_shape=jax.ShapeDtypeStruct((m, d_out), out_dtype),
            grid_spec=pltpu.PrefetchScalarGridSpec(
                num_scalar_prefetch=0,
                grid=(nm,),
                in_specs=[
                    pl.BlockSpec((tm, d_in), lambda i: (i, 0)),          # x rows
                    pl.BlockSpec((d_in, d_hid), lambda i: (0, 0), **wkw),  # W1
                    pl.BlockSpec((1, d_hid), lambda i: (0, 0), **wkw),     # b1
                    pl.BlockSpec((d_hid, d_out), lambda i: (0, 0), **wkw),  # W2
                    pl.BlockSpec((1, d_out), lambda i: (0, 0), **wkw),      # b2
                ],
                out_specs=pl.BlockSpec((tm, d_out), lambda i: (i, 0)),
            ),
            compiler_params=pltpu.CompilerParams(
                dimension_semantics=("parallel",),
                vmem_limit_bytes=vmem_limit),
            cost_estimate=cost,
        )

    args = (x2, w1c, b1c, w2c, b2c)
    try:
        out = _build(True)(*args)
    except Exception:
        # pipeline_mode / Buffered(1) not supported by this JAX build:
        # fall back to default double-buffered (still correct, slightly more VMEM).
        out = _build(False)(*args)

    return out.reshape(*orig_shape[:-1], d_out)


def init_mlp_params(key, hidden_size, mlp_dim):
    """Matches Mlp._init_weights: xavier_uniform weights, normal(std=1e-6) bias.
    Weights stored (in, out) so the kernel computes x @ W directly (PyTorch
    Linear stores (out, in) and applies x @ W^T — same math)."""
    k1, k2, k3, k4 = jax.random.split(key, 4)

    def xavier_uniform(k, fan_in, fan_out):
        limit = math.sqrt(6.0 / (fan_in + fan_out))
        return jax.random.uniform(k, (fan_in, fan_out), jnp.float32,
                                  -limit, limit)

    w1 = xavier_uniform(k1, hidden_size, mlp_dim)
    b1 = jax.random.normal(k2, (mlp_dim,), jnp.float32) * 1e-6
    w2 = xavier_uniform(k3, mlp_dim, hidden_size)
    b2 = jax.random.normal(k4, (hidden_size,), jnp.float32) * 1e-6
    return (w1, b1, w2, b2)


if __name__ == "__main__":
    key = jax.random.PRNGKey(0)
    kp, kx = jax.random.split(key)

    # config.hidden_size = 32, config.transformer['mlp_dim'] = 128
    hidden_size, mlp_dim = 32, 128
    B, S = 2, 8

    params = init_mlp_params(kp, hidden_size, mlp_dim)
    x = jax.random.normal(kx, (B, S, hidden_size), jnp.float32)

    out = jax.block_until_ready(mlp_forward(x, params))

    # Pure-JAX reference mirroring the kernel numerics (bf16 operands, f32
    # accumulation); dropout is identity in eval mode.
    w1, b1, w2, b2 = params

    def _bf(a):
        return a.astype(jnp.bfloat16).astype(jnp.float32)

    x2 = x.reshape(-1, hidden_size)
    h_ref = jnp.maximum(_bf(x2) @ _bf(w1) + b1, 0.0)
    ref = (_bf(h_ref) @ _bf(w2) + b2).reshape(B, S, hidden_size)

    assert out.shape == (B, S, hidden_size), f"bad shape {out.shape}"
    assert bool(jnp.all(jnp.isfinite(out)))
    assert jnp.allclose(out, ref, rtol=2e-3, atol=2e-3), \
        f"max abs err {jnp.max(jnp.abs(out - ref))}"
    print("KERNEL_OK")
</pallas_src>

<mosaic_0001>
module attributes {stable_mosaic.version = 11 : i64} {
  func.func @_mlp_kernel(%arg0: i32, %arg1: memref<8x32xbf16, #tpu.memory_space<vmem>>, %arg2: memref<32x128xbf16, #tpu.memory_space<vmem>>, %arg3: memref<1x128xf32, #tpu.memory_space<vmem>>, %arg4: memref<128x32xbf16, #tpu.memory_space<vmem>>, %arg5: memref<1x32xf32, #tpu.memory_space<vmem>>, %arg6: memref<8x32xf32, #tpu.memory_space<vmem>>) attributes {dimension_semantics = [#tpu.dimension_semantics<parallel>], iteration_bounds = array<i64: 2>, scalar_prefetch = 0 : i64, scratch_operands = 0 : i64, tpu.core_type = #tpu.core_type<tc>, window_params = [{transform_indices = @transform_0, window_bounds = array<i64: 8, 32>}, {pipeline_mode = #tpu.pipeline_mode<synchronous>, transform_indices = @transform_1, window_bounds = array<i64: 32, 128>}, {pipeline_mode = #tpu.pipeline_mode<synchronous>, transform_indices = @transform_2, window_bounds = array<i64: 1, 128>}, {pipeline_mode = #tpu.pipeline_mode<synchronous>, transform_indices = @transform_3, window_bounds = array<i64: 128, 32>}, {pipeline_mode = #tpu.pipeline_mode<synchronous>, transform_indices = @transform_4, window_bounds = array<i64: 1, 32>}, {transform_indices = @transform_5, window_bounds = array<i64: 8, 32>}]} {
    %c0 = arith.constant 0 : index
    %c0_0 = arith.constant 0 : index
    %0 = vector.load %arg1[%c0, %c0_0] : memref<8x32xbf16, #tpu.memory_space<vmem>>, vector<8x32xbf16>
    %c0_1 = arith.constant 0 : index
    %c0_2 = arith.constant 0 : index
    %1 = vector.load %arg2[%c0_1, %c0_2] : memref<32x128xbf16, #tpu.memory_space<vmem>>, vector<32x128xbf16>
    %cst = arith.constant dense<0.000000e+00> : vector<8x128xf32>
    %2 = tpu.matmul %0, %1, %cst {dimension_numbers = #tpu.dot_dimension_numbers<[1], [0], [0], [1], [0, 0, 1, 1], [], []>} : vector<8x32xbf16>, vector<32x128xbf16>, vector<8x128xf32> -> vector<8x128xf32>
    %c0_3 = arith.constant 0 : index
    %c0_4 = arith.constant 0 : index
    %3 = vector.load %arg3[%c0_3, %c0_4] : memref<1x128xf32, #tpu.memory_space<vmem>>, vector<1x128xf32>
    %4 = vector.broadcast %3 : vector<1x128xf32> to vector<8x128xf32>
    %5 = arith.addf %2, %4 : vector<8x128xf32>
    %cst_5 = arith.constant 0.000000e+00 : f32
    %6 = vector.broadcast %cst_5 : f32 to vector<8x128xf32>
    %7 = arith.maximumf %5, %6 : vector<8x128xf32>
    %8 = arith.truncf %7 : vector<8x128xf32> to vector<8x128xbf16>
    %c0_6 = arith.constant 0 : index
    %c0_7 = arith.constant 0 : index
    %9 = vector.load %arg4[%c0_6, %c0_7] : memref<128x32xbf16, #tpu.memory_space<vmem>>, vector<128x32xbf16>
    %cst_8 = arith.constant dense<0.000000e+00> : vector<8x32xf32>
    %10 = tpu.matmul %8, %9, %cst_8 {dimension_numbers = #tpu.dot_dimension_numbers<[1], [0], [0], [1], [0, 0, 1, 1], [], []>} : vector<8x128xbf16>, vector<128x32xbf16>, vector<8x32xf32> -> vector<8x32xf32>
    %c0_9 = arith.constant 0 : index
    %c0_10 = arith.constant 0 : index
    %11 = vector.load %arg5[%c0_9, %c0_10] : memref<1x32xf32, #tpu.memory_space<vmem>>, vector<1x32xf32>
    %12 = vector.broadcast %11 : vector<1x32xf32> to vector<8x32xf32>
    %13 = arith.addf %10, %12 : vector<8x32xf32>
    %c0_11 = arith.constant 0 : index
    %c0_12 = arith.constant 0 : index
    %14 = vector.load %arg6[%c0_11, %c0_12] : memref<8x32xf32, #tpu.memory_space<vmem>>, vector<8x32xf32>
    tpu.vector_store %arg6[%c0_11, %c0_12], %13 {strides = array<i32>} : memref<8x32xf32, #tpu.memory_space<vmem>>, vector<8x32xf32>,
    return
  }
  func.func @transform_0(%arg0: i32) -> (i32, i32) {
    %c0_i32 = arith.constant 0 : i32
    %c0_i32_0 = arith.constant 0 : i32
    return %arg0, %c0_i32 : i32, i32
  }
  func.func @transform_1(%arg0: i32) -> (i32, i32) {
    %c0_i32 = arith.constant 0 : i32
    %c0_i32_0 = arith.constant 0 : i32
    %c0_i32_1 = arith.constant 0 : i32
    return %c0_i32, %c0_i32_0 : i32, i32
  }
  func.func @transform_2(%arg0: i32) -> (i32, i32) {
    %c0_i32 = arith.constant 0 : i32
    %c0_i32_0 = arith.constant 0 : i32
    %c0_i32_1 = arith.constant 0 : i32
    return %c0_i32, %c0_i32_0 : i32, i32
  }
  func.func @transform_3(%arg0: i32) -> (i32, i32) {
    %c0_i32 = arith.constant 0 : i32
    %c0_i32_0 = arith.constant 0 : i32
    %c0_i32_1 = arith.constant 0 : i32
    return %c0_i32, %c0_i32_0 : i32, i32
  }
  func.func @transform_4(%arg0: i32) -> (i32, i32) {
    %c0_i32 = arith.constant 0 : i32
    %c0_i32_0 = arith.constant 0 : i32
    %c0_i32_1 = arith.constant 0 : i32
    return %c0_i32, %c0_i32_0 : i32, i32
  }
  func.func @transform_5(%arg0: i32) -> (i32, i32) {
    %c0_i32 = arith.constant 0 : i32
    %c0_i32_0 = arith.constant 0 : i32
    return %arg0, %c0_i32 : i32, i32
  }
}

module attributes {stable_mosaic.version = 11 : i64} {
  func.func @_mlp_kernel(%arg0: i32, %arg1: memref<8x32xbf16, #tpu.memory_space<vmem>>, %arg2: memref<32x128xbf16, #tpu.memory_space<vmem>>, %arg3: memref<1x128xf32, #tpu.memory_space<vmem>>, %arg4: memref<128x32xbf16, #tpu.memory_space<vmem>>, %arg5: memref<1x32xf32, #tpu.memory_space<vmem>>, %arg6: memref<8x32xf32, #tpu.memory_space<vmem>>) attributes {dimension_semantics = [#tpu.dimension_semantics<parallel>], iteration_bounds = array<i64: 2>, scalar_prefetch = 0 : i64, scratch_operands = 0 : i64, tpu.core_type = #tpu.core_type<tc>, window_params = [{transform_indices = @transform_0, window_bounds = array<i64: 8, 32>}, {pipeline_mode = #tpu.pipeline_mode<synchronous>, transform_indices = @transform_1, window_bounds = array<i64: 32, 128>}, {pipeline_mode = #tpu.pipeline_mode<synchronous>, transform_indices = @transform_2, window_bounds = array<i64: 1, 128>}, {pipeline_mode = #tpu.pipeline_mode<synchronous>, transform_indices = @transform_3, window_bounds = array<i64: 128, 32>}, {pipeline_mode = #tpu.pipeline_mode<synchronous>, transform_indices = @transform_4, window_bounds = array<i64: 1, 32>}, {transform_indices = @transform_5, window_bounds = array<i64: 8, 32>}]} {
    %c0 = arith.constant 0 : index
    %c0_0 = arith.constant 0 : index
    %0 = vector.load %arg1[%c0, %c0_0] : memref<8x32xbf16, #tpu.memory_space<vmem>>, vector<8x32xbf16>
    %c0_1 = arith.constant 0 : index
    %c0_2 = arith.constant 0 : index
    %1 = vector.load %arg2[%c0_1, %c0_2] : memref<32x128xbf16, #tpu.memory_space<vmem>>, vector<32x128xbf16>
    %cst = arith.constant dense<0.000000e+00> : vector<8x128xf32>
    %2 = tpu.matmul %0, %1, %cst {dimension_numbers = #tpu.dot_dimension_numbers<[1], [0], [0], [1], [0, 0, 1, 1], [], []>} : vector<8x32xbf16>, vector<32x128xbf16>, vector<8x128xf32> -> vector<8x128xf32>
    %c0_3 = arith.constant 0 : index
    %c0_4 = arith.constant 0 : index
    %3 = vector.load %arg3[%c0_3, %c0_4] : memref<1x128xf32, #tpu.memory_space<vmem>>, vector<1x128xf32>
    %4 = vector.broadcast %3 : vector<1x128xf32> to vector<8x128xf32>
    %5 = arith.addf %2, %4 : vector<8x128xf32>
    %cst_5 = arith.constant 0.000000e+00 : f32
    %6 = vector.broadcast %cst_5 : f32 to vector<8x128xf32>
    %7 = arith.maximumf %5, %6 : vector<8x128xf32>
    %8 = arith.truncf %7 : vector<8x128xf32> to vector<8x128xbf16>
    %c0_6 = arith.constant 0 : index
    %c0_7 = arith.constant 0 : index
    %9 = vector.load %arg4[%c0_6, %c0_7] : memref<128x32xbf16, #tpu.memory_space<vmem>>, vector<128x32xbf16>
    %cst_8 = arith.constant dense<0.000000e+00> : vector<8x32xf32>
    %10 = tpu.matmul %8, %9, %cst_8 {dimension_numbers = #tpu.dot_dimension_numbers<[1], [0], [0], [1], [0, 0, 1, 1], [], []>} : vector<8x128xbf16>, vector<128x32xbf16>, vector<8x32xf32> -> vector<8x32xf32>
    %c0_9 = arith.constant 0 : index
    %c0_10 = arith.constant 0 : index
    %11 = vector.load %arg5[%c0_9, %c0_10] : memref<1x32xf32, #tpu.memory_space<vmem>>, vector<1x32xf32>
    %12 = vector.broadcast %11 : vector<1x32xf32> to vector<8x32xf32>
    %13 = arith.addf %10, %12 : vector<8x32xf32>
    %c0_11 = arith.constant 0 : index
    %c0_12 = arith.constant 0 : index
    %14 = vector.load %arg6[%c0_11, %c0_12] : memref<8x32xf32, #tpu.memory_space<vmem>>, vector<8x32xf32>
    tpu.vector_store %arg6[%c0_11, %c0_12], %13 {strides = array<i32>} : memref<8x32xf32, #tpu.memory_space<vmem>>, vector<8x32xf32>,
    return
  }
  func.func @transform_0(%arg0: i32) -> (i32, i32) {
    %c0_i32 = arith.constant 0 : i32
    %c0_i32_0 = arith.constant 0 : i32
    return %arg0, %c0_i32 : i32, i32
  }
  func.func @transform_1(%arg0: i32) -> (i32, i32) {
    %c0_i32 = arith.constant 0 : i32
    %c0_i32_0 = arith.constant 0 : i32
    %c0_i32_1 = arith.constant 0 : i32
    return %c0_i32, %c0_i32_0 : i32, i32
  }
  func.func @transform_2(%arg0: i32) -> (i32, i32) {
    %c0_i32 = arith.constant 0 : i32
    %c0_i32_0 = arith.constant 0 : i32
    %c0_i32_1 = arith.constant 0 : i32
    return %c0_i32, %c0_i32_0 : i32, i32
  }
  func.func @transform_3(%arg0: i32) -> (i32, i32) {
    %c0_i32 = arith.constant 0 : i32
    %c0_i32_0 = arith.constant 0 : i32
    %c0_i32_1 = arith.constant 0 : i32
    return %c0_i32, %c0_i32_0 : i32, i32
  }
  func.func @transform_4(%arg0: i32) -> (i32, i32) {
    %c0_i32 = arith.constant 0 : i32
    %c0_i32_0 = arith.constant 0 : i32
    %c0_i32_1 = arith.constant 0 : i32
    return %c0_i32, %c0_i32_0 : i32, i32
  }
  func.func @transform_5(%arg0: i32) -> (i32, i32) {
    %c0_i32 = arith.constant 0 : i32
    %c0_i32_0 = arith.constant 0 : i32
    return %arg0, %c0_i32 : i32, i32
  }
}

</mosaic_0001>

<llo_original>
// kernel: tpu_custom_call.1
$region0: #{tpu_custom_call.1}
  #allocation0 [shape = 'u32[]', space=smem, size = 0x4, offset = 0x4, fixed_abs, tag = 'smem constant byte address 0x4 - core index']
  #allocation1 [shape = 'u32[72,128]{1,0:T(1,128)}', space=vmem, size = 0x9000, scoped, tag = 'internal scratch']
  %s0 = inlined_call_operand.vmem [shape: bf16[16,32], index: 0, kind: input, shape index: {}]
  %s1 = inlined_call_operand.vmem [shape: bf16[32,128], index: 1, kind: input, shape index: {}]
  %s2 = inlined_call_operand.vmem [shape: f32[1,128], index: 2, kind: input, shape index: {}]
  %s3 = inlined_call_operand.vmem [shape: bf16[128,32], index: 3, kind: input, shape index: {}]
  %s4 = inlined_call_operand.vmem [shape: f32[1,32], index: 4, kind: input, shape index: {}]
  %s5 = inlined_call_operand.hbm [shape: f32[16,32], index: 5, kind: output, shape index: {}]
  %s6 = sld [smem:[#allocation0]]
  $region53: #{tpu_custom_call.1} parent=0
    _
  %s8 = ssub.s32 1, %s6
  %s9 = scalar_select 0, %s8, %s6
  $region1: #{tpu_custom_call.1} parent=0
    #allocation2 [shape = 'u8[8192]{0}', space=vmem, size = 0x2000, scoped, tag = 'output window, operand 0']
    #allocation3 [shape = 's32[2]{0}', space=sflag, size = 0x8, scoped, tag = 'scoped memory for tpu_custom_call.1']
    %10 = vsyncpa [#allocation3], 0
    %s11 = scalar_lea.sflag [#allocation3], 1
    %12 = vsyncpa %s11, 0
    loop: start=0, step=1, limit=4
    $region2: #{tpu_custom_call.1} parent=1 // loop_pre_header
      _
    $region3: #{tpu_custom_call.1} parent=1 // loop_header
      %s14 = sphi 0, %s18
      %p15 = scmp.ge.s32.totalorder %s14, 4
      %s24 = sphi 0, %s26
      %s27 = sphi 0, %s24
      %s28 = sphi 0, %s27
      %s44 = sphi 0, %s28
      %s48 = sphi 0, %s48
      %s50 = sphi 0, %s48
      %s51 = sphi 0, %s50
      %s65 = sphi 0, %s51
      %s69 = sphi 0, %s69
      %s71 = sphi 0, %s69
      %s72 = sphi 0, %s71
      %s86 = sphi 0, %s72
      %s90 = sphi 0, %s90
      %s92 = sphi 0, %s90
      %s93 = sphi 0, %s92
      %s107 = sphi 0, %s93
      %s111 = sphi 0, %s111
      %s113 = sphi 0, %s111
      %s114 = sphi 0, %s113
      %s128 = sphi 0, %s114
      %s134 = sphi 0, %s136
      %s137 = sphi 0, %s134
      %s138 = sphi 0, %s137
      %s154 = sphi 0, %s138
    $region4: #{tpu_custom_call.1} parent=1 // loop_header_branch
      %17 = sbr.rel (%p15) target = $region8
    $region5: #{tpu_custom_call.1} parent=1 // loop_body
      %s19 = ssub.s32 %s14, 1
      %s20 = ssub.s32 %s14, 2
      %s21 = sadd.s32 %s14, 1
      %s22 = ssub.s32 %s14, %s21
      %p23 = scmp.eq.s32.totalorder %s22, 0
      %s25 = sadd.s32 %s24, 1
      %s26 = scalar_select %p23, %s24, %s25
      %p29 = pneg %p23
      %p30 = scmp.eq.s32.totalorder %s14, 1
      %p31 = por %p29, %p30
      %p32 = scmp.ne.s32.totalorder %s24, %s27
      %p33 = scmp.eq.s32.totalorder %s14, 0
      %p34 = por %p32, %p33
      %p35 = scmp.ne.s32.totalorder %s24, %s27
      %p36 = scmp.eq.s32.totalorder %s19, 1
      %p37 = por %p35, %p36
      %p38 = scmp.ne.s32.totalorder %s27, %s28
      %p39 = scmp.eq.s32.totalorder %s19, 0
      %p40 = por %p38, %p39
      %p41 = scmp.ne.s32.totalorder %s27, %s28
      %p42 = scmp.eq.s32.totalorder %s20, 1
      %p43 = por %p41, %p42
      %p45 = scmp.ne.s32.totalorder %s28, %s44
      %p46 = scmp.eq.s32.totalorder %s20, 0
      %p47 = por %p45, %p46
      %s49 = sadd.s32 %s48, 1
      %p52 = scmp.eq.s32.totalorder %s14, 1
      %p53 = scmp.ne.s32.totalorder %s48, %s50
      %p54 = scmp.eq.s32.totalorder %s14, 0
      %p55 = por %p53, %p54
      %p56 = scmp.ne.s32.totalorder %s48, %s50
      %p57 = scmp.eq.s32.totalorder %s19, 1
      %p58 = por %p56, %p57
      %p59 = scmp.ne.s32.totalorder %s50, %s51
      %p60 = scmp.eq.s32.totalorder %s19, 0
      %p61 = por %p59, %p60
      %p62 = scmp.ne.s32.totalorder %s50, %s51
      %p63 = scmp.eq.s32.totalorder %s20, 1
      %p64 = por %p62, %p63
      %p66 = scmp.ne.s32.totalorder %s51, %s65
      %p67 = scmp.eq.s32.totalorder %s20, 0
      %p68 = por %p66, %p67
      %s70 = sadd.s32 %s69, 1
      %p73 = scmp.eq.s32.totalorder %s14, 1
      %p74 = scmp.ne.s32.totalorder %s69, %s71
      %p75 = scmp.eq.s32.totalorder %s14, 0
      %p76 = por %p74, %p75
      %p77 = scmp.ne.s32.totalorder %s69, %s71
      %p78 = scmp.eq.s32.totalorder %s19, 1
      %p79 = por %p77, %p78
      %p80 = scmp.ne.s32.totalorder %s71, %s72
      %p81 = scmp.eq.s32.totalorder %s19, 0
      %p82 = por %p80, %p81
      %p83 = scmp.ne.s32.totalorder %s71, %s72
      %p84 = scmp.eq.s32.totalorder %s20, 1
      %p85 = por %p83, %p84
      %p87 = scmp.ne.s32.totalorder %s72, %s86
      %p88 = scmp.eq.s32.totalorder %s20, 0
      %p89 = por %p87, %p88
      %s91 = sadd.s32 %s90, 1
      %p94 = scmp.eq.s32.totalorder %s14, 1
      %p95 = scmp.ne.s32.totalorder %s90, %s92
      %p96 = scmp.eq.s32.totalorder %s14, 0
      %p97 = por %p95, %p96
      %p98 = scmp.ne.s32.totalorder %s90, %s92
      %p99 = scmp.eq.s32.totalorder %s19, 1
      %p100 = por %p98, %p99
      %p101 = scmp.ne.s32.totalorder %s92, %s93
      %p102 = scmp.eq.s32.totalorder %s19, 0
      %p103 = por %p101, %p102
      %p104 = scmp.ne.s32.totalorder %s92, %s93
      %p105 = scmp.eq.s32.totalorder %s20, 1
      %p106 = por %p104, %p105
      %p108 = scmp.ne.s32.totalorder %s93, %s107
      %p109 = scmp.eq.s32.totalorder %s20, 0
      %p110 = por %p108, %p109
      %s112 = sadd.s32 %s111, 1
      %p115 = scmp.eq.s32.totalorder %s14, 1
      %p116 = scmp.ne.s32.totalorder %s111, %s113
      %p117 = scmp.eq.s32.totalorder %s14, 0
      %p118 = por %p116, %p117
      %p119 = scmp.ne.s32.totalorder %s111, %s113
      %p120 = scmp.eq.s32.totalorder %s19, 1
      %p121 = por %p119, %p120
      %p122 = scmp.ne.s32.totalorder %s113, %s114
      %p123 = scmp.eq.s32.totalorder %s19, 0
      %p124 = por %p122, %p123
      %p125 = scmp.ne.s32.totalorder %s113, %s114
      %p126 = scmp.eq.s32.totalorder %s20, 1
      %p127 = por %p125, %p126
      %p129 = scmp.ne.s32.totalorder %s114, %s128
      %p130 = scmp.eq.s32.totalorder %s20, 0
      %p131 = por %p129, %p130
      %s132 = ssub.s32 %s14, %s21
      %p133 = scmp.eq.s32.totalorder %s132, 0
      %s135 = sadd.s32 %s134, 1
      %s136 = scalar_select %p133, %s134, %s135
      %p139 = pneg %p133
      %p140 = scmp.eq.s32.totalorder %s14, 1
      %p141 = por %p139, %p140
      %p142 = scmp.ne.s32.totalorder %s134, %s137
      %p143 = scmp.eq.s32.totalorder %s14, 0
      %p144 = por %p142, %p143
      %p145 = scmp.ne.s32.totalorder %s134, %s137
      %p146 = scmp.eq.s32.totalorder %s19, 1
      %p147 = por %p145, %p146
      %p148 = scmp.ne.s32.totalorder %s137, %s138
      %p149 = scmp.eq.s32.totalorder %s19, 0
      %p150 = por %p148, %p149
      %p151 = scmp.ne.s32.totalorder %s137, %s138
      %p152 = scmp.eq.s32.totalorder %s20, 1
      %p153 = por %p151, %p152
      %p155 = scmp.ne.s32.totalorder %s138, %s154
      %p156 = scmp.eq.s32.totalorder %s20, 0
      %p157 = por %p155, %p156
      %p158 = scmp.le.s32.totalorder 1, %s14
      %p159 = scmp.lt.s32.totalorder %s14, 3
      %p160 = pnand %p158, %p159
      %p161 = pneg %p160
      // Predicated region
      $region9: #{tpu_custom_call.1} parent=5 // pred_check
        _
      $region10: #{tpu_custom_call.1} parent=5 // pred_check_branch
        %163 = sbr.rel (%p160) target = $region12
      $region11: #{tpu_custom_call.1} parent=5 // pred_region
        %s164 = ssub.s32 %s14, 1
        // Predicated region
        $region13: #{tpu_custom_call.1} parent=11 // pred_check
          %p165 = pneg %p61
        $region14: #{tpu_custom_call.1} parent=11 // pred_check_branch
          %167 = sbr.rel (%p165) target = $region16
        $region15: #{tpu_custom_call.1} parent=11 // pred_region
          _
        $region16: #{tpu_custom_call.1} parent=11 // pred_fallthru
          _
        // Predicated region
        $region17: #{tpu_custom_call.1} parent=11 // pred_check
          %p168 = pneg %p82
        $region18: #{tpu_custom_call.1} parent=11 // pred_check_branch
          %170 = sbr.rel (%p168) target = $region20
        $region19: #{tpu_custom_call.1} parent=11 // pred_region
          _
        $region20: #{tpu_custom_call.1} parent=11 // pred_fallthru
          _
        // Predicated region
        $region21: #{tpu_custom_call.1} parent=11 // pred_check
          %p171 = pneg %p103
        $region22: #{tpu_custom_call.1} parent=11 // pred_check_branch
          %173 = sbr.rel (%p171) target = $region24
        $region23: #{tpu_custom_call.1} parent=11 // pred_region
          _
        $region24: #{tpu_custom_call.1} parent=11 // pred_fallthru
          _
        // Predicated region
        $region25: #{tpu_custom_call.1} parent=11 // pred_check
          %p174 = pneg %p124
        $region26: #{tpu_custom_call.1} parent=11 // pred_check_branch
          %176 = sbr.rel (%p174) target = $region28
        $region27: #{tpu_custom_call.1} parent=11 // pred_region
          _
        $region28: #{tpu_custom_call.1} parent=11 // pred_fallthru
          _
      $region12: #{tpu_custom_call.1} parent=5 // pred_fallthru
        _
      %p177 = scmp.lt.s32.totalorder %s14, 2
      // Predicated region
      $region29: #{tpu_custom_call.1} parent=5 // pred_check
        %p178 = pneg %p177
      $region30: #{tpu_custom_call.1} parent=5 // pred_check_branch
        %180 = sbr.rel (%p178) target = $region32
      $region31: #{tpu_custom_call.1} parent=5 // pred_region
        // Predicated region
        $region33: #{tpu_custom_call.1} parent=31 // pred_check
          %p181 = pneg %p34
        $region34: #{tpu_custom_call.1} parent=31 // pred_check_branch
          %183 = sbr.rel (%p181) target = $region36
        $region35: #{tpu_custom_call.1} parent=31 // pred_region
          %p184 = scmp.lt.s32.totalorder %s14, 1
          %s185 = scalar_select %p184, %s14, 1
          %s186 = smul.addr %s185, 4
          %s187 = scalar_lea.vmem %s0, %s186
        $region36: #{tpu_custom_call.1} parent=31 // pred_fallthru
          _
      $region32: #{tpu_custom_call.1} parent=5 // pred_fallthru
        _
      %p188 = scmp.le.s32.totalorder 1, %s14
      %p189 = scmp.lt.s32.totalorder %s14, 3
      %p190 = pnand %p188, %p189
      %p191 = pneg %p190
      // Predicated region
      $region37: #{tpu_custom_call.1} parent=5 // pred_check
        _
      $region38: #{tpu_custom_call.1} parent=5 // pred_check_branch
        %193 = sbr.rel (%p190) target = $region40
      $region39: #{tpu_custom_call.1} parent=5 // pred_region
        %s194 = ssub.s32 %s14, 1
        %p195 = scmp.lt.s32.totalorder %s19, 1
        %s196 = scalar_select %p195, %s19, 1
        %s197 = smul.addr %s196, 4
        %s198 = scalar_lea.vmem %s0, %s197
        %p199 = pneg %p40
        %p200 = pneg %p37
        %p201 = pneg %p61
        %p202 = pneg %p58
        %p203 = pneg %p82
        %p204 = pneg %p79
        %p205 = pneg %p103
        %p206 = pneg %p100
        %p207 = pneg %p124
        %p208 = pneg %p121
        %p209 = pneg %p150
        %p210 = pneg %p147
        %s211 = sand.u32 %s137, 1
        %s212 = scalar_lea.sflag [#allocation3], %s211
        %s213 = sand.u32 %s137, 1
        %s214 = smul.addr %s213, 8
        %s215 = scalar_lea.vmem [#allocation2], %s214
        %p216 = scmp.lt.s32.totalorder %s19, 1
        %s217 = scalar_select %p216, %s19, 1
        %s218 = smul.addr %s217, 4
        %s219 = scalar_lea.vmem %s0, %s218
        %v221 = vld [vmem:[%s219] sm:$0xf]
        %v222 = vld [vmem:[%s1] sm:$0xf]
        %v223 = vld [vmem:[%s1 + $0x4] sm:$0xf]
        %v224 = vld [vmem:[%s1 + $0x8] sm:$0xf]
        %v225 = vld [vmem:[%s1 + $0xc] sm:$0xf]
        %v226 = vld [vmem:[%s2] sm:$0x1]
        %v228 = vperm.slane %v226, 0
        %v234 = vunpack.c.l.b16 %v222
        %v235 = vunpack.c.l.b16 %v223
        %v236 = vunpack.c.l.b16 %v224
        %v237 = vunpack.c.l.b16 %v225
        %v238 = vpack.c.b16 %v235, %v234
        %v239 = vpack.c.b16 %v237, %v236
        %vm242 = vcmask 261120
        %v244 = vsel %vm242, %v221, 0
        %246 = vmatpush.bf16.msra.mxu0 0
        %247 = vmatpush.bf16.msra.mxu0 0
        %248 = vmatpush.bf16.msra.mxu0 0
        %249 = vmatpush.bf16.msra.mxu0 0
        %250 = vmatpush.bf16.msra.mxu0 0
        %251 = vmatpush.bf16.msra.mxu0 0
        %252 = vmatpush.bf16.msra.mxu0 %v239
        %253 = vmatpush.bf16.msra.mxu0 %v238
        %254 = vmatmul.bf16.gmra.mxu0 %v244
        %v255 = vpop.f32.mrf.mxu0
        %v256 = vadd.f32 %v228, %v255
        %v257 = vpop.f32.mrf.mxu0
        %258 = vdwg.mxu0
        %v259 = vmax.f32 %v256, 0.0
        %v260 = vpack.c.bf16 %v259, %v259
        %v261 = vld [vmem:[%s3] sm:$0xf]
        %v262 = vld [vmem:[%s3 + $0x4] sm:$0xf]
        %v263 = vld [vmem:[%s3 + $0x8] sm:$0xf]
        %v264 = vld [vmem:[%s3 + $0xc] sm:$0xf]
        %v265 = vld [vmem:[%s3 + $0x10] sm:$0xf]
        %v266 = vld [vmem:[%s3 + $0x14] sm:$0xf]
        %v267 = vld [vmem:[%s3 + $0x18] sm:$0xf]
        %v268 = vld [vmem:[%s3 + $0x1c] sm:$0xf]
        %v269 = vld [vmem:[%s3 + $0x20] sm:$0xf]
        %v270 = vld [vmem:[%s3 + $0x24] sm:$0xf]
        %v271 = vld [vmem:[%s3 + $0x28] sm:$0xf]
        %v272 = vld [vmem:[%s3 + $0x2c] sm:$0xf]
        %v273 = vld [vmem:[%s3 + $0x30] sm:$0xf]
        %v274 = vld [vmem:[%s3 + $0x34] sm:$0xf]
        %v275 = vld [vmem:[%s3 + $0x38] sm:$0xf]
        %v276 = vld [vmem:[%s3 + $0x3c] sm:$0xf]
        %v277 = vld [vmem:[%s4] sm:$0x1]
        %v279 = vperm.slane %v277, 0
        %v297 = vunpack.c.l.b16 %v261
        %v298 = vunpack.c.l.b16 %v262
        %v299 = vunpack.c.l.b16 %v263
        %v300 = vunpack.c.l.b16 %v264
        %v301 = vunpack.c.l.b16 %v265
        %v302 = vunpack.c.l.b16 %v266
        %v303 = vunpack.c.l.b16 %v267
        %v304 = vunpack.c.l.b16 %v268
        %v305 = vunpack.c.l.b16 %v269
        %v306 = vunpack.c.l.b16 %v270
        %v307 = vunpack.c.l.b16 %v271
        %v308 = vunpack.c.l.b16 %v272
        %v309 = vunpack.c.l.b16 %v273
        %v310 = vunpack.c.l.b16 %v274
        %v311 = vunpack.c.l.b16 %v275
        %v312 = vunpack.c.l.b16 %v276
        %v313 = vpack.c.b16 %v298, %v297
        %v314 = vpack.c.b16 %v300, %v299
        %v315 = vpack.c.b16 %v302, %v301
        %v316 = vpack.c.b16 %v304, %v303
        %v317 = vpack.c.b16 %v306, %v305
        %v318 = vpack.c.b16 %v308, %v307
        %v319 = vpack.c.b16 %v310, %v309
        %v320 = vpack.c.b16 %v312, %v311
        %329 = vmatpush.bf16.msra.mxu0 %v320
        %330 = vmatpush.bf16.msra.mxu0 %v319
        %331 = vmatpush.bf16.msra.mxu0 %v318
        %332 = vmatpush.bf16.msra.mxu0 %v317
        %333 = vmatpush.bf16.msra.mxu0 %v316
        %334 = vmatpush.bf16.msra.mxu0 %v315
        %335 = vmatpush.bf16.msra.mxu0 %v314
        %336 = vmatpush.bf16.msra.mxu0 %v313
        %337 = vmatmul.bf16.gmra.mxu0 %v260
        %v338 = vpop.f32.mrf.mxu0
        %v339 = vadd.f32 %v279, %v338
        %v340 = vpop.f32.mrf.mxu0
        %341 = vdwg.mxu0
        %342 = vst.msk [vmem:[%s215] sm:$0xff] %vm242, %v339
        %s343 = sand.u32 %s137, 1
        %s344 = scalar_lea.sflag [#allocation3], %s343
        %s345 = sand.u32 %s137, 1
        %s346 = smul.addr %s345, 8
        %s347 = scalar_lea.vmem [#allocation2], %s346
        // Predicated region
        $region41: #{tpu_custom_call.1} parent=39 // pred_check
          %p348 = pneg %p147
        $region42: #{tpu_custom_call.1} parent=39 // pred_check_branch
          %350 = sbr.rel (%p348) target = $region44
        $region43: #{tpu_custom_call.1} parent=39 // pred_region
          %352 = vsyncadd %s344, 0
          %s353 = smul.addr %s19, 8
          %s354 = scalar_lea.hbm %s5, %s353
          %s356 = sshll.u32 %s347, 4
          %s357 = int_to_ptr.vmem [resolvable:$true] %s356
          %s358 = sshll.u32 %s354, 4
          %s359 = int_to_ptr.hbm [resolvable:$true] %s358
          %361 = dma.vmem_to_hbm [thread:$0]  %s357, 128, %s359, %s344
        $region44: #{tpu_custom_call.1} parent=39 // pred_fallthru
          _
      $region40: #{tpu_custom_call.1} parent=5 // pred_fallthru
        _
      %p362 = scmp.le.s32.totalorder 2, %s14
      // Predicated region
      $region45: #{tpu_custom_call.1} parent=5 // pred_check
        %p363 = pneg %p362
      $region46: #{tpu_custom_call.1} parent=5 // pred_check_branch
        %365 = sbr.rel (%p363) target = $region48
      $region47: #{tpu_custom_call.1} parent=5 // pred_region
        %s366 = ssub.s32 %s14, 2
        // Predicated region
        $region49: #{tpu_custom_call.1} parent=47 // pred_check
          %p367 = pneg %p153
        $region50: #{tpu_custom_call.1} parent=47 // pred_check_branch
          %369 = sbr.rel (%p367) target = $region52
        $region51: #{tpu_custom_call.1} parent=47 // pred_region
          %s370 = sand.u32 %s138, 1
          %s371 = scalar_lea.sflag [#allocation3], %s370
          %s372 = sand.u32 %s138, 1
          %s373 = smul.addr %s372, 8
          %s374 = scalar_lea.vmem [#allocation2], %s373
          %376 = dma.done %s371, 128
        $region52: #{tpu_custom_call.1} parent=47 // pred_fallthru
          _
      $region48: #{tpu_custom_call.1} parent=5 // pred_fallthru
        _
    $region6: #{tpu_custom_call.1} parent=1 // loop_footer
      %s18 = sadd.s32 1, %s14
    $region7: #{tpu_custom_call.1} parent=1 // loop_footer_branch
      %13 = sbr.rel target = $region3
    $region8: #{tpu_custom_call.1} parent=1 // loop_exit
      _
    %377 = vsyncpa [#allocation3], 1
    %s378 = scalar_lea.sflag [#allocation3], 1
    %379 = vsyncpa %s378, 1

// kernel: tpu_custom_call.1
$region0: #{tpu_custom_call.1}
  #allocation0 [shape = 'u32[]', space=smem, size = 0x4, offset = 0x4, fixed_abs, tag = 'smem constant byte address 0x4 - core index']
  #allocation1 [shape = 'u32[72,128]{1,0:T(1,128)}', space=vmem, size = 0x9000, scoped, tag = 'internal scratch']
  %s0 = inlined_call_operand.vmem [shape: bf16[16,32], index: 0, kind: input, shape index: {}]
  %s1 = inlined_call_operand.vmem [shape: bf16[32,128], index: 1, kind: input, shape index: {}]
  %s2 = inlined_call_operand.vmem [shape: f32[1,128], index: 2, kind: input, shape index: {}]
  %s3 = inlined_call_operand.vmem [shape: bf16[128,32], index: 3, kind: input, shape index: {}]
  %s4 = inlined_call_operand.vmem [shape: f32[1,32], index: 4, kind: input, shape index: {}]
  %s5 = inlined_call_operand.hbm [shape: f32[16,32], index: 5, kind: output, shape index: {}]
  %s6 = sld [smem:[#allocation0]]
  $region53: #{tpu_custom_call.1} parent=0
    _
  %s8 = ssub.s32 1, %s6
  %s9 = scalar_select 0, %s8, %s6
  $region1: #{tpu_custom_call.1} parent=0
    #allocation2 [shape = 'u8[8192]{0}', space=vmem, size = 0x2000, scoped, tag = 'output window, operand 0']
    #allocation3 [shape = 's32[2]{0}', space=sflag, size = 0x8, scoped, tag = 'scoped memory for tpu_custom_call.1']
    %10 = vsyncpa [#allocation3], 0
    %s11 = scalar_lea.sflag [#allocation3], 1
    %12 = vsyncpa %s11, 0
    loop: start=0, step=1, limit=4
    $region2: #{tpu_custom_call.1} parent=1 // loop_pre_header
      _
    $region3: #{tpu_custom_call.1} parent=1 // loop_header
      %s14 = sphi 0, %s18
      %p15 = scmp.ge.s32.totalorder %s14, 4
      %s24 = sphi 0, %s26
      %s27 = sphi 0, %s24
      %s28 = sphi 0, %s27
      %s44 = sphi 0, %s28
      %s48 = sphi 0, %s48
      %s50 = sphi 0, %s48
      %s51 = sphi 0, %s50
      %s65 = sphi 0, %s51
      %s69 = sphi 0, %s69
      %s71 = sphi 0, %s69
      %s72 = sphi 0, %s71
      %s86 = sphi 0, %s72
      %s90 = sphi 0, %s90
      %s92 = sphi 0, %s90
      %s93 = sphi 0, %s92
      %s107 = sphi 0, %s93
      %s111 = sphi 0, %s111
      %s113 = sphi 0, %s111
      %s114 = sphi 0, %s113
      %s128 = sphi 0, %s114
      %s134 = sphi 0, %s136
      %s137 = sphi 0, %s134
      %s138 = sphi 0, %s137
      %s154 = sphi 0, %s138
    $region4: #{tpu_custom_call.1} parent=1 // loop_header_branch
      %17 = sbr.rel (%p15) target = $region8
    $region5: #{tpu_custom_call.1} parent=1 // loop_body
      %s19 = ssub.s32 %s14, 1
      %s20 = ssub.s32 %s14, 2
      %s21 = sadd.s32 %s14, 1
      %s22 = ssub.s32 %s14, %s21
      %p23 = scmp.eq.s32.totalorder %s22, 0
      %s25 = sadd.s32 %s24, 1
      %s26 = scalar_select %p23, %s24, %s25
      %p29 = pneg %p23
      %p30 = scmp.eq.s32.totalorder %s14, 1
      %p31 = por %p29, %p30
      %p32 = scmp.ne.s32.totalorder %s24, %s27
      %p33 = scmp.eq.s32.totalorder %s14, 0
      %p34 = por %p32, %p33
      %p35 = scmp.ne.s32.totalorder %s24, %s27
      %p36 = scmp.eq.s32.totalorder %s19, 1
      %p37 = por %p35, %p36
      %p38 = scmp.ne.s32.totalorder %s27, %s28
      %p39 = scmp.eq.s32.totalorder %s19, 0
      %p40 = por %p38, %p39
      %p41 = scmp.ne.s32.totalorder %s27, %s28
      %p42 = scmp.eq.s32.totalorder %s20, 1
      %p43 = por %p41, %p42
      %p45 = scmp.ne.s32.totalorder %s28, %s44
      %p46 = scmp.eq.s32.totalorder %s20, 0
      %p47 = por %p45, %p46
      %s49 = sadd.s32 %s48, 1
      %p52 = scmp.eq.s32.totalorder %s14, 1
      %p53 = scmp.ne.s32.totalorder %s48, %s50
      %p54 = scmp.eq.s32.totalorder %s14, 0
      %p55 = por %p53, %p54
      %p56 = scmp.ne.s32.totalorder %s48, %s50
      %p57 = scmp.eq.s32.totalorder %s19, 1
      %p58 = por %p56, %p57
      %p59 = scmp.ne.s32.totalorder %s50, %s51
      %p60 = scmp.eq.s32.totalorder %s19, 0
      %p61 = por %p59, %p60
      %p62 = scmp.ne.s32.totalorder %s50, %s51
      %p63 = scmp.eq.s32.totalorder %s20, 1
      %p64 = por %p62, %p63
      %p66 = scmp.ne.s32.totalorder %s51, %s65
      %p67 = scmp.eq.s32.totalorder %s20, 0
      %p68 = por %p66, %p67
      %s70 = sadd.s32 %s69, 1
      %p73 = scmp.eq.s32.totalorder %s14, 1
      %p74 = scmp.ne.s32.totalorder %s69, %s71
      %p75 = scmp.eq.s32.totalorder %s14, 0
      %p76 = por %p74, %p75
      %p77 = scmp.ne.s32.totalorder %s69, %s71
      %p78 = scmp.eq.s32.totalorder %s19, 1
      %p79 = por %p77, %p78
      %p80 = scmp.ne.s32.totalorder %s71, %s72
      %p81 = scmp.eq.s32.totalorder %s19, 0
      %p82 = por %p80, %p81
      %p83 = scmp.ne.s32.totalorder %s71, %s72
      %p84 = scmp.eq.s32.totalorder %s20, 1
      %p85 = por %p83, %p84
      %p87 = scmp.ne.s32.totalorder %s72, %s86
      %p88 = scmp.eq.s32.totalorder %s20, 0
      %p89 = por %p87, %p88
      %s91 = sadd.s32 %s90, 1
      %p94 = scmp.eq.s32.totalorder %s14, 1
      %p95 = scmp.ne.s32.totalorder %s90, %s92
      %p96 = scmp.eq.s32.totalorder %s14, 0
      %p97 = por %p95, %p96
      %p98 = scmp.ne.s32.totalorder %s90, %s92
      %p99 = scmp.eq.s32.totalorder %s19, 1
      %p100 = por %p98, %p99
      %p101 = scmp.ne.s32.totalorder %s92, %s93
      %p102 = scmp.eq.s32.totalorder %s19, 0
      %p103 = por %p101, %p102
      %p104 = scmp.ne.s32.totalorder %s92, %s93
      %p105 = scmp.eq.s32.totalorder %s20, 1
      %p106 = por %p104, %p105
      %p108 = scmp.ne.s32.totalorder %s93, %s107
      %p109 = scmp.eq.s32.totalorder %s20, 0
      %p110 = por %p108, %p109
      %s112 = sadd.s32 %s111, 1
      %p115 = scmp.eq.s32.totalorder %s14, 1
      %p116 = scmp.ne.s32.totalorder %s111, %s113
      %p117 = scmp.eq.s32.totalorder %s14, 0
      %p118 = por %p116, %p117
      %p119 = scmp.ne.s32.totalorder %s111, %s113
      %p120 = scmp.eq.s32.totalorder %s19, 1
      %p121 = por %p119, %p120
      %p122 = scmp.ne.s32.totalorder %s113, %s114
      %p123 = scmp.eq.s32.totalorder %s19, 0
      %p124 = por %p122, %p123
      %p125 = scmp.ne.s32.totalorder %s113, %s114
      %p126 = scmp.eq.s32.totalorder %s20, 1
      %p127 = por %p125, %p126
      %p129 = scmp.ne.s32.totalorder %s114, %s128
      %p130 = scmp.eq.s32.totalorder %s20, 0
      %p131 = por %p129, %p130
      %s132 = ssub.s32 %s14, %s21
      %p133 = scmp.eq.s32.totalorder %s132, 0
      %s135 = sadd.s32 %s134, 1
      %s136 = scalar_select %p133, %s134, %s135
      %p139 = pneg %p133
      %p140 = scmp.eq.s32.totalorder %s14, 1
      %p141 = por %p139, %p140
      %p142 = scmp.ne.s32.totalorder %s134, %s137
      %p143 = scmp.eq.s32.totalorder %s14, 0
      %p144 = por %p142, %p143
      %p145 = scmp.ne.s32.totalorder %s134, %s137
      %p146 = scmp.eq.s32.totalorder %s19, 1
      %p147 = por %p145, %p146
      %p148 = scmp.ne.s32.totalorder %s137, %s138
      %p149 = scmp.eq.s32.totalorder %s19, 0
      %p150 = por %p148, %p149
      %p151 = scmp.ne.s32.totalorder %s137, %s138
      %p152 = scmp.eq.s32.totalorder %s20, 1
      %p153 = por %p151, %p152
      %p155 = scmp.ne.s32.totalorder %s138, %s154
      %p156 = scmp.eq.s32.totalorder %s20, 0
      %p157 = por %p155, %p156
      %p158 = scmp.le.s32.totalorder 1, %s14
      %p159 = scmp.lt.s32.totalorder %s14, 3
      %p160 = pnand %p158, %p159
      %p161 = pneg %p160
      // Predicated region
      $region9: #{tpu_custom_call.1} parent=5 // pred_check
        _
      $region10: #{tpu_custom_call.1} parent=5 // pred_check_branch
        %163 = sbr.rel (%p160) target = $region12
      $region11: #{tpu_custom_call.1} parent=5 // pred_region
        %s164 = ssub.s32 %s14, 1
        // Predicated region
        $region13: #{tpu_custom_call.1} parent=11 // pred_check
          %p165 = pneg %p61
        $region14: #{tpu_custom_call.1} parent=11 // pred_check_branch
          %167 = sbr.rel (%p165) target = $region16
        $region15: #{tpu_custom_call.1} parent=11 // pred_region
          _
        $region16: #{tpu_custom_call.1} parent=11 // pred_fallthru
          _
        // Predicated region
        $region17: #{tpu_custom_call.1} parent=11 // pred_check
          %p168 = pneg %p82
        $region18: #{tpu_custom_call.1} parent=11 // pred_check_branch
          %170 = sbr.rel (%p168) target = $region20
        $region19: #{tpu_custom_call.1} parent=11 // pred_region
          _
        $region20: #{tpu_custom_call.1} parent=11 // pred_fallthru
          _
        // Predicated region
        $region21: #{tpu_custom_call.1} parent=11 // pred_check
          %p171 = pneg %p103
        $region22: #{tpu_custom_call.1} parent=11 // pred_check_branch
          %173 = sbr.rel (%p171) target = $region24
        $region23: #{tpu_custom_call.1} parent=11 // pred_region
          _
        $region24: #{tpu_custom_call.1} parent=11 // pred_fallthru
          _
        // Predicated region
        $region25: #{tpu_custom_call.1} parent=11 // pred_check
          %p174 = pneg %p124
        $region26: #{tpu_custom_call.1} parent=11 // pred_check_branch
          %176 = sbr.rel (%p174) target = $region28
        $region27: #{tpu_custom_call.1} parent=11 // pred_region
          _
        $region28: #{tpu_custom_call.1} parent=11 // pred_fallthru
          _
      $region12: #{tpu_custom_call.1} parent=5 // pred_fallthru
        _
      %p177 = scmp.lt.s32.totalorder %s14, 2
      // Predicated region
      $region29: #{tpu_custom_call.1} parent=5 // pred_check
        %p178 = pneg %p177
      $region30: #{tpu_custom_call.1} parent=5 // pred_check_branch
        %180 = sbr.rel (%p178) target = $region32
      $region31: #{tpu_custom_call.1} parent=5 // pred_region
        // Predicated region
        $region33: #{tpu_custom_call.1} parent=31 // pred_check
          %p181 = pneg %p34
        $region34: #{tpu_custom_call.1} parent=31 // pred_check_branch
          %183 = sbr.rel (%p181) target = $region36
        $region35: #{tpu_custom_call.1} parent=31 // pred_region
          %p184 = scmp.lt.s32.totalorder %s14, 1
          %s185 = scalar_select %p184, %s14, 1
          %s186 = smul.addr %s185, 4
          %s187 = scalar_lea.vmem %s0, %s186
        $region36: #{tpu_custom_call.1} parent=31 // pred_fallthru
          _
      $region32: #{tpu_custom_call.1} parent=5 // pred_fallthru
        _
      %p188 = scmp.le.s32.totalorder 1, %s14
      %p189 = scmp.lt.s32.totalorder %s14, 3
      %p190 = pnand %p188, %p189
      %p191 = pneg %p190
      // Predicated region
      $region37: #{tpu_custom_call.1} parent=5 // pred_check
        _
      $region38: #{tpu_custom_call.1} parent=5 // pred_check_branch
        %193 = sbr.rel (%p190) target = $region40
      $region39: #{tpu_custom_call.1} parent=5 // pred_region
        %s194 = ssub.s32 %s14, 1
        %p195 = scmp.lt.s32.totalorder %s19, 1
        %s196 = scalar_select %p195, %s19, 1
        %s197 = smul.addr %s196, 4
        %s198 = scalar_lea.vmem %s0, %s197
        %p199 = pneg %p40
        %p200 = pneg %p37
        %p201 = pneg %p61
        %p202 = pneg %p58
        %p203 = pneg %p82
        %p204 = pneg %p79
        %p205 = pneg %p103
        %p206 = pneg %p100
        %p207 = pneg %p124
        %p208 = pneg %p121
        %p209 = pneg %p150
        %p210 = pneg %p147
        %s211 = sand.u32 %s137, 1
        %s212 = scalar_lea.sflag [#allocation3], %s211
        %s213 = sand.u32 %s137, 1
        %s214 = smul.addr %s213, 8
        %s215 = scalar_lea.vmem [#allocation2], %s214
        %p216 = scmp.lt.s32.totalorder %s19, 1
        %s217 = scalar_select %p216, %s19, 1
        %s218 = smul.addr %s217, 4
        %s219 = scalar_lea.vmem %s0, %s218
        %v221 = vld [vmem:[%s219] sm:$0xf]
        %v222 = vld [vmem:[%s1] sm:$0xf]
        %v223 = vld [vmem:[%s1 + $0x4] sm:$0xf]
        %v224 = vld [vmem:[%s1 + $0x8] sm:$0xf]
        %v225 = vld [vmem:[%s1 + $0xc] sm:$0xf]
        %v226 = vld [vmem:[%s2] sm:$0x1]
        %v228 = vperm.slane %v226, 0
        %v234 = vunpack.c.l.b16 %v222
        %v235 = vunpack.c.l.b16 %v223
        %v236 = vunpack.c.l.b16 %v224
        %v237 = vunpack.c.l.b16 %v225
        %v238 = vpack.c.b16 %v235, %v234
        %v239 = vpack.c.b16 %v237, %v236
        %vm242 = vcmask 261120
        %v244 = vsel %vm242, %v221, 0
        %246 = vmatpush.bf16.msra.mxu0 0
        %247 = vmatpush.bf16.msra.mxu0 0
        %248 = vmatpush.bf16.msra.mxu0 0
        %249 = vmatpush.bf16.msra.mxu0 0
        %250 = vmatpush.bf16.msra.mxu0 0
        %251 = vmatpush.bf16.msra.mxu0 0
        %252 = vmatpush.bf16.msra.mxu0 %v239
        %253 = vmatpush.bf16.msra.mxu0 %v238
        %254 = vmatmul.bf16.gmra.mxu0 %v244
        %v255 = vpop.f32.mrf.mxu0
        %v256 = vadd.f32 %v228, %v255
        %v257 = vpop.f32.mrf.mxu0
        %258 = vdwg.mxu0
        %v259 = vmax.f32 %v256, 0.0
        %v260 = vpack.c.bf16 %v259, %v259
        %v261 = vld [vmem:[%s3] sm:$0xf]
        %v262 = vld [vmem:[%s3 + $0x4] sm:$0xf]
        %v263 = vld [vmem:[%s3 + $0x8] sm:$0xf]
        %v264 = vld [vmem:[%s3 + $0xc] sm:$0xf]
        %v265 = vld [vmem:[%s3 + $0x10] sm:$0xf]
        %v266 = vld [vmem:[%s3 + $0x14] sm:$0xf]
        %v267 = vld [vmem:[%s3 + $0x18] sm:$0xf]
        %v268 = vld [vmem:[%s3 + $0x1c] sm:$0xf]
        %v269 = vld [vmem:[%s3 + $0x20] sm:$0xf]
        %v270 = vld [vmem:[%s3 + $0x24] sm:$0xf]
        %v271 = vld [vmem:[%s3 + $0x28] sm:$0xf]
        %v272 = vld [vmem:[%s3 + $0x2c] sm:$0xf]
        %v273 = vld [vmem:[%s3 + $0x30] sm:$0xf]
        %v274 = vld [vmem:[%s3 + $0x34] sm:$0xf]
        %v275 = vld [vmem:[%s3 + $0x38] sm:$0xf]
        %v276 = vld [vmem:[%s3 + $0x3c] sm:$0xf]
        %v277 = vld [vmem:[%s4] sm:$0x1]
        %v279 = vperm.slane %v277, 0
        %v297 = vunpack.c.l.b16 %v261
        %v298 = vunpack.c.l.b16 %v262
        %v299 = vunpack.c.l.b16 %v263
        %v300 = vunpack.c.l.b16 %v264
        %v301 = vunpack.c.l.b16 %v265
        %v302 = vunpack.c.l.b16 %v266
        %v303 = vunpack.c.l.b16 %v267
        %v304 = vunpack.c.l.b16 %v268
        %v305 = vunpack.c.l.b16 %v269
        %v306 = vunpack.c.l.b16 %v270
        %v307 = vunpack.c.l.b16 %v271
        %v308 = vunpack.c.l.b16 %v272
        %v309 = vunpack.c.l.b16 %v273
        %v310 = vunpack.c.l.b16 %v274
        %v311 = vunpack.c.l.b16 %v275
        %v312 = vunpack.c.l.b16 %v276
        %v313 = vpack.c.b16 %v298, %v297
        %v314 = vpack.c.b16 %v300, %v299
        %v315 = vpack.c.b16 %v302, %v301
        %v316 = vpack.c.b16 %v304, %v303
        %v317 = vpack.c.b16 %v306, %v305
        %v318 = vpack.c.b16 %v308, %v307
        %v319 = vpack.c.b16 %v310, %v309
        %v320 = vpack.c.b16 %v312, %v311
        %329 = vmatpush.bf16.msra.mxu0 %v320
        %330 = vmatpush.bf16.msra.mxu0 %v319
        %331 = vmatpush.bf16.msra.mxu0 %v318
        %332 = vmatpush.bf16.msra.mxu0 %v317
        %333 = vmatpush.bf16.msra.mxu0 %v316
        %334 = vmatpush.bf16.msra.mxu0 %v315
        %335 = vmatpush.bf16.msra.mxu0 %v314
        %336 = vmatpush.bf16.msra.mxu0 %v313
        %337 = vmatmul.bf16.gmra.mxu0 %v260
        %v338 = vpop.f32.mrf.mxu0
        %v339 = vadd.f32 %v279, %v338
        %v340 = vpop.f32.mrf.mxu0
        %341 = vdwg.mxu0
        %342 = vst.msk [vmem:[%s215] sm:$0xff] %vm242, %v339
        %s343 = sand.u32 %s137, 1
        %s344 = scalar_lea.sflag [#allocation3], %s343
        %s345 = sand.u32 %s137, 1
        %s346 = smul.addr %s345, 8
        %s347 = scalar_lea.vmem [#allocation2], %s346
        // Predicated region
        $region41: #{tpu_custom_call.1} parent=39 // pred_check
          %p348 = pneg %p147
        $region42: #{tpu_custom_call.1} parent=39 // pred_check_branch
          %350 = sbr.rel (%p348) target = $region44
        $region43: #{tpu_custom_call.1} parent=39 // pred_region
          %352 = vsyncadd %s344, 0
          %s353 = smul.addr %s19, 8
          %s354 = scalar_lea.hbm %s5, %s353
          %s356 = sshll.u32 %s347, 4
          %s357 = int_to_ptr.vmem [resolvable:$true] %s356
          %s358 = sshll.u32 %s354, 4
          %s359 = int_to_ptr.hbm [resolvable:$true] %s358
          %361 = dma.vmem_to_hbm [thread:$0]  %s357, 128, %s359, %s344
        $region44: #{tpu_custom_call.1} parent=39 // pred_fallthru
          _
      $region40: #{tpu_custom_call.1} parent=5 // pred_fallthru
        _
      %p362 = scmp.le.s32.totalorder 2, %s14
      // Predicated region
      $region45: #{tpu_custom_call.1} parent=5 // pred_check
        %p363 = pneg %p362
      $region46: #{tpu_custom_call.1} parent=5 // pred_check_branch
        %365 = sbr.rel (%p363) target = $region48
      $region47: #{tpu_custom_call.1} parent=5 // pred_region
        %s366 = ssub.s32 %s14, 2
        // Predicated region
        $region49: #{tpu_custom_call.1} parent=47 // pred_check
          %p367 = pneg %p153
        $region50: #{tpu_custom_call.1} parent=47 // pred_check_branch
          %369 = sbr.rel (%p367) target = $region52
        $region51: #{tpu_custom_call.1} parent=47 // pred_region
          %s370 = sand.u32 %s138, 1
          %s371 = scalar_lea.sflag [#allocation3], %s370
          %s372 = sand.u32 %s138, 1
          %s373 = smul.addr %s372, 8
          %s374 = scalar_lea.vmem [#allocation2], %s373
          %376 = dma.done %s371, 128
        $region52: #{tpu_custom_call.1} parent=47 // pred_fallthru
          _
      $region48: #{tpu_custom_call.1} parent=5 // pred_fallthru
        _
    $region6: #{tpu_custom_call.1} parent=1 // loop_footer
      %s18 = sadd.s32 1, %s14
    $region7: #{tpu_custom_call.1} parent=1 // loop_footer_branch
      %13 = sbr.rel target = $region3
    $region8: #{tpu_custom_call.1} parent=1 // loop_exit
      _
    %377 = vsyncpa [#allocation3], 1
    %s378 = scalar_lea.sflag [#allocation3], 1
    %379 = vsyncpa %s378, 1

</llo_original>
